<compile_context>
chip_gen: v7x
topology: tpu7x:2x2x1
jax: 0.10.0
libtpu: 0.0.40
codegen_flags: <defaults>
</compile_context>

<pallas_src>
import functools

import jax
import jax.numpy as jnp
from jax.experimental import pallas as pl
from jax.experimental.pallas import tpu as pltpu

# ----------------------------- model config ---------------------------------
CONFIG = {
    "hidden_layer": [32, 32],
    "input_bitwidth": 4,
    "activation_bitwidth": [2, 2],
    "output_bitwidth": 4,
    "input_fanin": 8,
    "neuron_fanin": [4, 4],
}
INPUT_LENGTH = 64        # = prod(self.shape) = 1*8*8  (nn.Flatten pre-transform)
ENCODED_DIM = 16
BN_EPS = 1e-5

_H0, _H1 = CONFIG["hidden_layer"]                        # 32, 32
_B_OFF = (0, _H0, _H0 + _H1, _H0 + _H1 + ENCODED_DIM)    # packed-bias offsets

# Quantizer grid sizes (brevitas INT, max_val=1, PARAMETER scale at init).
# TODO(synk): verify brevitas scale convention (1/2^(b-1) vs 1/(2^(b-1)-1));
# kept identical to the previous kernel version.
_N_IN = 2.0 ** (CONFIG["input_bitwidth"] - 1)                  # 8  (QuantHardTanh)
_M_ACT = [2.0 ** b - 1.0 for b in CONFIG["activation_bitwidth"]]  # [3, 3] (QuantReLU)
_N_OUT = 2.0 ** (CONFIG["output_bitwidth"] - 1)                # 8  (QuantHardTanh)


# --------------------------- in-kernel body ----------------------------------
def _encoder_kernel(qp, cdt, x_ref, w0_ref, w1_ref, w2_ref, b_ref, o_ref):
    """x_ref (TB, 64) f32 natural layout, weights (out,in) bf16 with BN and all
    quant scales folded, b_ref (80,1) f32 packed, o_ref (16, TB) bf16.

    Activations between layers are kept as small-integer quant codes (exact in
    bf16); the per-layer elementwise work is just add-bias, round, clip in
    `cdt` (bf16 on v6e/v7x, f32 on v5e)."""
    n_in, relu0, relu1, out_lo, out_hi, out_scale = qp
    nt = (((1,), (1,)), ((), ()))        # contract minor dims: W @ x^T (no transpose)

    # input_quant: QuantHardTanh -> integer codes in [-8, 7] (exact in bf16).
    xq = jnp.clip(jnp.round(x_ref[...] * n_in), -n_in, n_in - 1.0)     # (TB, 64) f32
    xq = xq.astype(jnp.bfloat16)

    # layer 0: BN + quant-scale folded sparse linear -> QuantReLU codes {0..3}
    b0 = b_ref[_B_OFF[0]:_B_OFF[1], :].astype(cdt)                     # (32, 1)
    z0 = jax.lax.dot_general(w0_ref[...], xq, nt,
                             preferred_element_type=jnp.float32).astype(cdt)
    a0 = jnp.clip(jnp.round(z0 + b0), 0.0, relu0).astype(jnp.bfloat16)  # (32, TB)

    # layer 1
    b1 = b_ref[_B_OFF[1]:_B_OFF[2], :].astype(cdt)                     # (32, 1)
    z1 = jnp.dot(w1_ref[...], a0, preferred_element_type=jnp.float32).astype(cdt)
    a1 = jnp.clip(jnp.round(z1 + b1), 0.0, relu1).astype(jnp.bfloat16)  # (32, TB)

    # output layer -> QuantHardTanh, dequantized to [-1, 1)
    b2 = b_ref[_B_OFF[2]:_B_OFF[3], :].astype(cdt)                     # (16, 1)
    z2 = jnp.dot(w2_ref[...], a1, preferred_element_type=jnp.float32).astype(cdt)
    y = jnp.clip(jnp.round(z2 + b2), out_lo, out_hi) * out_scale        # (16, TB)

    o_ref[...] = y.astype(o_ref.dtype)                                  # lane-dense


# ------------------------------ wrapper --------------------------------------
def _round_up(x, m):
    return (x + m - 1) // m * m


def _choose_tile_b(b_pad, target=2048):
    """Largest 128-multiple tile that divides b_pad, <= target, leaving >= 2
    grid steps when possible (v7x dual-TC + pipelining)."""
    n = b_pad // 128
    max_chunks = min(max(target // 128, 1), n)
    if n >= 2:
        max_chunks = max(min(max_chunks, n // 2), 1)
    d = max_chunks
    while n % d:
        d -= 1
    return d * 128


def _default_compute_dtype():
    # bf16 packed VALUs exist on v6e/v7x; keep f32 elementwise on v5e & older.
    try:
        kind = jax.devices()[0].device_kind.lower()
    except Exception:
        return jnp.float32
    if any(tag in kind for tag in ("v6", "v7", "7x", "trillium")):
        return jnp.bfloat16
    return jnp.float32


def encoder_forward(x_nchw, params, *, target_tile_b=2048, compute_dtype=None):
    """params: {"w": [w0,w1,w2] bf16 (out,in) BN+scale folded, "bias": (80,1) f32}.
    Returns (B, 16) bf16 (quantized grid points are exact in bf16)."""
    B = x_nchw.shape[0]
    x2d = x_nchw.reshape(B, INPUT_LENGTH)                 # nn.Flatten(): free reshape

    b_pad = _round_up(B, 128)
    if b_pad != B:                                        # minimal 128-row alignment
        x2d = jnp.pad(x2d, ((0, b_pad - B), (0, 0)))
    tile_b = _choose_tile_b(b_pad, target_tile_b)
    grid = b_pad // tile_b

    if compute_dtype is None:
        compute_dtype = _default_compute_dtype()

    qp = (_N_IN, _M_ACT[0], _M_ACT[1], -_N_OUT, _N_OUT - 1.0, 1.0 / _N_OUT)
    w0, w1, w2 = params["w"]
    bias = params["bias"]

    out_fm = pl.pallas_call(
        functools.partial(_encoder_kernel, qp, compute_dtype),
        out_shape=jax.ShapeDtypeStruct((ENCODED_DIM, b_pad), jnp.bfloat16),
        grid=(grid,),
        in_specs=[
            pl.BlockSpec((tile_b, INPUT_LENGTH), lambda i: (i, 0)),   # x stream
            pl.BlockSpec(w0.shape, lambda i: (0, 0)),                 # resident
            pl.BlockSpec(w1.shape, lambda i: (0, 0)),                 # resident
            pl.BlockSpec(w2.shape, lambda i: (0, 0)),                 # resident
            pl.BlockSpec(bias.shape, lambda i: (0, 0)),               # resident
        ],
        out_specs=pl.BlockSpec((ENCODED_DIM, tile_b), lambda i: (0, i)),
        compiler_params=pltpu.CompilerParams(
            dimension_semantics=("parallel",)),
    )(x2d, w0, w1, w2, bias)

    # TODO(synk): a feature-major consumer could take out_fm[:, :B] directly and
    # skip this tiny bf16 transpose pass.
    return out_fm[:, :B].T                                            # (B, 16) bf16


# --------------------------- parameter setup ---------------------------------
def _random_fixed_sparsity_mask(key, in_features, out_features, fan_in):
    """RandomFixedSparsityMask2D: each output neuron sees `fan_in` random inputs."""
    keys = jax.random.split(key, out_features)
    rows = []
    for k in keys:
        idx = jax.random.permutation(k, in_features)[:fan_in]
        rows.append(jnp.zeros((in_features,), jnp.float32).at[idx].set(1.0))
    return jnp.stack(rows)  # (out, in)


def _make_layer_params(key, in_f, out_f, fan_in, in_div, out_mul):
    kw, kb, km, kg, kbe, kmu, kv = jax.random.split(key, 7)
    bound = 1.0 / jnp.sqrt(float(in_f))
    w = jax.random.uniform(kw, (out_f, in_f), jnp.float32, -bound, bound)
    b = jax.random.uniform(kb, (out_f,), jnp.float32, -bound, bound)
    mask = _random_fixed_sparsity_mask(km, in_f, out_f, fan_in)

    gamma = 1.0 + 0.1 * jax.random.normal(kg, (out_f,))
    beta = 0.1 * jax.random.normal(kbe, (out_f,))
    mean = 0.05 * jax.random.normal(kmu, (out_f,))
    var = 1.0 + jnp.abs(0.1 * jax.random.normal(kv, (out_f,)))

    # TODO(synk): BatchNorm1d folded with eval-mode running statistics;
    # train-mode batch statistics would need a per-call batch reduction.
    scale = gamma * jax.lax.rsqrt(var + BN_EPS)                       # (out,)
    # Fold BN and the constant quant scales:
    #   incoming integer codes carry an implicit 1/in_div, and this layer's
    #   quantizer multiplies its pre-activation by out_mul before rounding.
    w_folded = (w * mask) * scale[:, None] * (out_mul / in_div)       # (out, in)
    b_folded = ((b - mean) * scale + beta) * out_mul                  # (out,)
    return w_folded, b_folded


def make_params(key):
    dims = [INPUT_LENGTH] + CONFIG["hidden_layer"] + [ENCODED_DIM]
    fanins = [CONFIG["input_fanin"]] + CONFIG["neuron_fanin"]
    in_div = [_N_IN, _M_ACT[0], _M_ACT[1]]        # dequant divisor of layer input codes
    out_mul = [_M_ACT[0], _M_ACT[1], _N_OUT]      # requant multiplier of layer output
    keys = jax.random.split(key, len(dims) - 1)
    ws, bs = [], []
    for i in range(len(dims) - 1):
        w, b = _make_layer_params(keys[i], dims[i], dims[i + 1], fanins[i],
                                  in_div[i], out_mul[i])
        ws.append(w.astype(jnp.bfloat16))          # MXU-native weights
        bs.append(b.astype(jnp.float32))
    bias = jnp.concatenate(bs, axis=0)[:, None]    # (80, 1) packed f32 biases
    return {"w": ws, "bias": bias}


# ------------------------------- main -----------------------------------------
if __name__ == "__main__":
    root = jax.random.PRNGKey(0)
    kx, kp = jax.random.split(root)

    # input: (B, 1, 8, 8) NCHW, flattened to (B, 64) by the input quantizer
    x = jax.random.normal(kx, (8, 1, 8, 8), jnp.float32)
    params = make_params(kp)

    try:
        out = jax.block_until_ready(encoder_forward(x, params))
    except Exception:
        # Conservative fallback: f32 elementwise path (valid on every TPU gen).
        out = jax.block_until_ready(
            encoder_forward(x, params, compute_dtype=jnp.float32))

    assert out.shape == (8, ENCODED_DIM)
    assert out.dtype == jnp.bfloat16
    out_f32 = out.astype(jnp.float32)
    assert bool(jnp.all(jnp.isfinite(out_f32)))
    assert bool(jnp.all(jnp.abs(out_f32) <= 1.0))   # output QuantHardTanh range
    print("KERNEL_OK")
</pallas_src>

<mosaic_0001>
module attributes {stable_mosaic.version = 11 : i64} {
  func.func @_encoder_kernel(%arg0: i32, %arg1: memref<128x64xf32, #tpu.memory_space<vmem>>, %arg2: memref<32x64xbf16, #tpu.memory_space<vmem>>, %arg3: memref<32x32xbf16, #tpu.memory_space<vmem>>, %arg4: memref<16x32xbf16, #tpu.memory_space<vmem>>, %arg5: memref<80x1xf32, #tpu.memory_space<vmem>>, %arg6: memref<16x128xbf16, #tpu.memory_space<vmem>>) attributes {dimension_semantics = [#tpu.dimension_semantics<parallel>], iteration_bounds = array<i64: 1>, scalar_prefetch = 0 : i64, scratch_operands = 0 : i64, tpu.core_type = #tpu.core_type<tc>, window_params = [{transform_indices = @transform_0, window_bounds = array<i64: 128, 64>}, {pipeline_mode = #tpu.pipeline_mode<synchronous>, transform_indices = @transform_1, window_bounds = array<i64: 32, 64>}, {pipeline_mode = #tpu.pipeline_mode<synchronous>, transform_indices = @transform_2, window_bounds = array<i64: 32, 32>}, {pipeline_mode = #tpu.pipeline_mode<synchronous>, transform_indices = @transform_3, window_bounds = array<i64: 16, 32>}, {pipeline_mode = #tpu.pipeline_mode<synchronous>, transform_indices = @transform_4, window_bounds = array<i64: 80, 1>}, {transform_indices = @transform_5, window_bounds = array<i64: 16, 128>}]} {
    %c0 = arith.constant 0 : index
    %c0_0 = arith.constant 0 : index
    %0 = vector.load %arg1[%c0, %c0_0] : memref<128x64xf32, #tpu.memory_space<vmem>>, vector<128x64xf32>
    %cst = arith.constant 8.000000e+00 : f32
    %1 = vector.broadcast %cst : f32 to vector<128x64xf32>
    %2 = arith.mulf %0, %1 : vector<128x64xf32>
    %3 = math.roundeven %2 : vector<128x64xf32>
    %cst_1 = arith.constant -8.000000e+00 : f32
    %cst_2 = arith.constant 7.000000e+00 : f32
    %4 = vector.broadcast %cst_1 : f32 to vector<128x64xf32>
    %5 = arith.maximumf %4, %3 : vector<128x64xf32>
    %6 = vector.broadcast %cst_2 : f32 to vector<128x64xf32>
    %7 = arith.minimumf %6, %5 : vector<128x64xf32>
    %8 = arith.truncf %7 : vector<128x64xf32> to vector<128x64xbf16>
    %c0_3 = arith.constant 0 : index
    %c0_4 = arith.constant 0 : index
    %9 = vector.load %arg5[%c0_3, %c0_4] : memref<80x1xf32, #tpu.memory_space<vmem>>, vector<32x1xf32>
    %c0_5 = arith.constant 0 : index
    %c0_6 = arith.constant 0 : index
    %10 = vector.load %arg2[%c0_5, %c0_6] : memref<32x64xbf16, #tpu.memory_space<vmem>>, vector<32x64xbf16>
    %cst_7 = arith.constant dense<0.000000e+00> : vector<32x128xf32>
    %11 = tpu.matmul %10, %8, %cst_7 {dimension_numbers = #tpu.dot_dimension_numbers<[1], [1], [0], [0], [0, 0, 1, 0], [], []>} : vector<32x64xbf16>, vector<128x64xbf16>, vector<32x128xf32> -> vector<32x128xf32>
    %12 = vector.broadcast %9 : vector<32x1xf32> to vector<32x128xf32>
    %13 = arith.addf %11, %12 : vector<32x128xf32>
    %14 = math.roundeven %13 : vector<32x128xf32>
    %cst_8 = arith.constant 0.000000e+00 : f32
    %cst_9 = arith.constant 3.000000e+00 : f32
    %15 = vector.broadcast %cst_8 : f32 to vector<32x128xf32>
    %16 = arith.maximumf %15, %14 : vector<32x128xf32>
    %17 = vector.broadcast %cst_9 : f32 to vector<32x128xf32>
    %18 = arith.minimumf %17, %16 : vector<32x128xf32>
    %19 = arith.truncf %18 : vector<32x128xf32> to vector<32x128xbf16>
    %c32 = arith.constant 32 : index
    %c0_10 = arith.constant 0 : index
    %20 = vector.load %arg5[%c32, %c0_10] : memref<80x1xf32, #tpu.memory_space<vmem>>, vector<32x1xf32>
    %c0_11 = arith.constant 0 : index
    %c0_12 = arith.constant 0 : index
    %21 = vector.load %arg3[%c0_11, %c0_12] : memref<32x32xbf16, #tpu.memory_space<vmem>>, vector<32x32xbf16>
    %cst_13 = arith.constant dense<0.000000e+00> : vector<32x128xf32>
    %22 = tpu.matmul %21, %19, %cst_13 {dimension_numbers = #tpu.dot_dimension_numbers<[1], [0], [0], [1], [0, 0, 1, 1], [], []>} : vector<32x32xbf16>, vector<32x128xbf16>, vector<32x128xf32> -> vector<32x128xf32>
    %23 = vector.broadcast %20 : vector<32x1xf32> to vector<32x128xf32>
    %24 = arith.addf %22, %23 : vector<32x128xf32>
    %25 = math.roundeven %24 : vector<32x128xf32>
    %cst_14 = arith.constant 0.000000e+00 : f32
    %cst_15 = arith.constant 3.000000e+00 : f32
    %26 = vector.broadcast %cst_14 : f32 to vector<32x128xf32>
    %27 = arith.maximumf %26, %25 : vector<32x128xf32>
    %28 = vector.broadcast %cst_15 : f32 to vector<32x128xf32>
    %29 = arith.minimumf %28, %27 : vector<32x128xf32>
    %30 = arith.truncf %29 : vector<32x128xf32> to vector<32x128xbf16>
    %c64 = arith.constant 64 : index
    %c0_16 = arith.constant 0 : index
    %31 = vector.load %arg5[%c64, %c0_16] : memref<80x1xf32, #tpu.memory_space<vmem>>, vector<16x1xf32>
    %c0_17 = arith.constant 0 : index
    %c0_18 = arith.constant 0 : index
    %32 = vector.load %arg4[%c0_17, %c0_18] : memref<16x32xbf16, #tpu.memory_space<vmem>>, vector<16x32xbf16>
    %cst_19 = arith.constant dense<0.000000e+00> : vector<16x128xf32>
    %33 = tpu.matmul %32, %30, %cst_19 {dimension_numbers = #tpu.dot_dimension_numbers<[1], [0], [0], [1], [0, 0, 1, 1], [], []>} : vector<16x32xbf16>, vector<32x128xbf16>, vector<16x128xf32> -> vector<16x128xf32>
    %34 = vector.broadcast %31 : vector<16x1xf32> to vector<16x128xf32>
    %35 = arith.addf %33, %34 : vector<16x128xf32>
    %36 = math.roundeven %35 : vector<16x128xf32>
    %cst_20 = arith.constant -8.000000e+00 : f32
    %cst_21 = arith.constant 7.000000e+00 : f32
    %37 = vector.broadcast %cst_20 : f32 to vector<16x128xf32>
    %38 = arith.maximumf %37, %36 : vector<16x128xf32>
    %39 = vector.broadcast %cst_21 : f32 to vector<16x128xf32>
    %40 = arith.minimumf %39, %38 : vector<16x128xf32>
    %cst_22 = arith.constant 1.250000e-01 : f32
    %41 = vector.broadcast %cst_22 : f32 to vector<16x128xf32>
    %42 = arith.mulf %40, %41 : vector<16x128xf32>
    %43 = arith.truncf %42 : vector<16x128xf32> to vector<16x128xbf16>
    %c0_23 = arith.constant 0 : index
    %c0_24 = arith.constant 0 : index
    %44 = vector.load %arg6[%c0_23, %c0_24] : memref<16x128xbf16, #tpu.memory_space<vmem>>, vector<16x128xbf16>
    tpu.vector_store %arg6[%c0_23, %c0_24], %43 {strides = array<i32>} : memref<16x128xbf16, #tpu.memory_space<vmem>>, vector<16x128xbf16>,
    return
  }
  func.func @transform_0(%arg0: i32) -> (i32, i32) {
    %c0_i32 = arith.constant 0 : i32
    %c0_i32_0 = arith.constant 0 : i32
    return %arg0, %c0_i32 : i32, i32
  }
  func.func @transform_1(%arg0: i32) -> (i32, i32) {
    %c0_i32 = arith.constant 0 : i32
    %c0_i32_0 = arith.constant 0 : i32
    %c0_i32_1 = arith.constant 0 : i32
    return %c0_i32, %c0_i32_0 : i32, i32
  }
  func.func @transform_2(%arg0: i32) -> (i32, i32) {
    %c0_i32 = arith.constant 0 : i32
    %c0_i32_0 = arith.constant 0 : i32
    %c0_i32_1 = arith.constant 0 : i32
    return %c0_i32, %c0_i32_0 : i32, i32
  }
  func.func @transform_3(%arg0: i32) -> (i32, i32) {
    %c0_i32 = arith.constant 0 : i32
    %c0_i32_0 = arith.constant 0 : i32
    %c0_i32_1 = arith.constant 0 : i32
    return %c0_i32, %c0_i32_0 : i32, i32
  }
  func.func @transform_4(%arg0: i32) -> (i32, i32) {
    %c0_i32 = arith.constant 0 : i32
    %c0_i32_0 = arith.constant 0 : i32
    %c0_i32_1 = arith.constant 0 : i32
    return %c0_i32, %c0_i32_0 : i32, i32
  }
  func.func @transform_5(%arg0: i32) -> (i32, i32) {
    %c0_i32 = arith.constant 0 : i32
    %c0_i32_0 = arith.constant 0 : i32
    return %c0_i32, %arg0 : i32, i32
  }
}

module attributes {stable_mosaic.version = 11 : i64} {
  func.func @_encoder_kernel(%arg0: i32, %arg1: memref<128x64xf32, #tpu.memory_space<vmem>>, %arg2: memref<32x64xbf16, #tpu.memory_space<vmem>>, %arg3: memref<32x32xbf16, #tpu.memory_space<vmem>>, %arg4: memref<16x32xbf16, #tpu.memory_space<vmem>>, %arg5: memref<80x1xf32, #tpu.memory_space<vmem>>, %arg6: memref<16x128xbf16, #tpu.memory_space<vmem>>) attributes {dimension_semantics = [#tpu.dimension_semantics<parallel>], iteration_bounds = array<i64: 1>, scalar_prefetch = 0 : i64, scratch_operands = 0 : i64, tpu.core_type = #tpu.core_type<tc>, window_params = [{transform_indices = @transform_0, window_bounds = array<i64: 128, 64>}, {pipeline_mode = #tpu.pipeline_mode<synchronous>, transform_indices = @transform_1, window_bounds = array<i64: 32, 64>}, {pipeline_mode = #tpu.pipeline_mode<synchronous>, transform_indices = @transform_2, window_bounds = array<i64: 32, 32>}, {pipeline_mode = #tpu.pipeline_mode<synchronous>, transform_indices = @transform_3, window_bounds = array<i64: 16, 32>}, {pipeline_mode = #tpu.pipeline_mode<synchronous>, transform_indices = @transform_4, window_bounds = array<i64: 80, 1>}, {transform_indices = @transform_5, window_bounds = array<i64: 16, 128>}]} {
    %c0 = arith.constant 0 : index
    %c0_0 = arith.constant 0 : index
    %0 = vector.load %arg1[%c0, %c0_0] : memref<128x64xf32, #tpu.memory_space<vmem>>, vector<128x64xf32>
    %cst = arith.constant 8.000000e+00 : f32
    %1 = vector.broadcast %cst : f32 to vector<128x64xf32>
    %2 = arith.mulf %0, %1 : vector<128x64xf32>
    %3 = math.roundeven %2 : vector<128x64xf32>
    %cst_1 = arith.constant -8.000000e+00 : f32
    %cst_2 = arith.constant 7.000000e+00 : f32
    %4 = vector.broadcast %cst_1 : f32 to vector<128x64xf32>
    %5 = arith.maximumf %4, %3 : vector<128x64xf32>
    %6 = vector.broadcast %cst_2 : f32 to vector<128x64xf32>
    %7 = arith.minimumf %6, %5 : vector<128x64xf32>
    %8 = arith.truncf %7 : vector<128x64xf32> to vector<128x64xbf16>
    %c0_3 = arith.constant 0 : index
    %c0_4 = arith.constant 0 : index
    %9 = vector.load %arg5[%c0_3, %c0_4] : memref<80x1xf32, #tpu.memory_space<vmem>>, vector<32x1xf32>
    %c0_5 = arith.constant 0 : index
    %c0_6 = arith.constant 0 : index
    %10 = vector.load %arg2[%c0_5, %c0_6] : memref<32x64xbf16, #tpu.memory_space<vmem>>, vector<32x64xbf16>
    %cst_7 = arith.constant dense<0.000000e+00> : vector<32x128xf32>
    %11 = tpu.matmul %10, %8, %cst_7 {dimension_numbers = #tpu.dot_dimension_numbers<[1], [1], [0], [0], [0, 0, 1, 0], [], []>} : vector<32x64xbf16>, vector<128x64xbf16>, vector<32x128xf32> -> vector<32x128xf32>
    %12 = vector.broadcast %9 : vector<32x1xf32> to vector<32x128xf32>
    %13 = arith.addf %11, %12 : vector<32x128xf32>
    %14 = math.roundeven %13 : vector<32x128xf32>
    %cst_8 = arith.constant 0.000000e+00 : f32
    %cst_9 = arith.constant 3.000000e+00 : f32
    %15 = vector.broadcast %cst_8 : f32 to vector<32x128xf32>
    %16 = arith.maximumf %15, %14 : vector<32x128xf32>
    %17 = vector.broadcast %cst_9 : f32 to vector<32x128xf32>
    %18 = arith.minimumf %17, %16 : vector<32x128xf32>
    %19 = arith.truncf %18 : vector<32x128xf32> to vector<32x128xbf16>
    %c32 = arith.constant 32 : index
    %c0_10 = arith.constant 0 : index
    %20 = vector.load %arg5[%c32, %c0_10] : memref<80x1xf32, #tpu.memory_space<vmem>>, vector<32x1xf32>
    %c0_11 = arith.constant 0 : index
    %c0_12 = arith.constant 0 : index
    %21 = vector.load %arg3[%c0_11, %c0_12] : memref<32x32xbf16, #tpu.memory_space<vmem>>, vector<32x32xbf16>
    %cst_13 = arith.constant dense<0.000000e+00> : vector<32x128xf32>
    %22 = tpu.matmul %21, %19, %cst_13 {dimension_numbers = #tpu.dot_dimension_numbers<[1], [0], [0], [1], [0, 0, 1, 1], [], []>} : vector<32x32xbf16>, vector<32x128xbf16>, vector<32x128xf32> -> vector<32x128xf32>
    %23 = vector.broadcast %20 : vector<32x1xf32> to vector<32x128xf32>
    %24 = arith.addf %22, %23 : vector<32x128xf32>
    %25 = math.roundeven %24 : vector<32x128xf32>
    %cst_14 = arith.constant 0.000000e+00 : f32
    %cst_15 = arith.constant 3.000000e+00 : f32
    %26 = vector.broadcast %cst_14 : f32 to vector<32x128xf32>
    %27 = arith.maximumf %26, %25 : vector<32x128xf32>
    %28 = vector.broadcast %cst_15 : f32 to vector<32x128xf32>
    %29 = arith.minimumf %28, %27 : vector<32x128xf32>
    %30 = arith.truncf %29 : vector<32x128xf32> to vector<32x128xbf16>
    %c64 = arith.constant 64 : index
    %c0_16 = arith.constant 0 : index
    %31 = vector.load %arg5[%c64, %c0_16] : memref<80x1xf32, #tpu.memory_space<vmem>>, vector<16x1xf32>
    %c0_17 = arith.constant 0 : index
    %c0_18 = arith.constant 0 : index
    %32 = vector.load %arg4[%c0_17, %c0_18] : memref<16x32xbf16, #tpu.memory_space<vmem>>, vector<16x32xbf16>
    %cst_19 = arith.constant dense<0.000000e+00> : vector<16x128xf32>
    %33 = tpu.matmul %32, %30, %cst_19 {dimension_numbers = #tpu.dot_dimension_numbers<[1], [0], [0], [1], [0, 0, 1, 1], [], []>} : vector<16x32xbf16>, vector<32x128xbf16>, vector<16x128xf32> -> vector<16x128xf32>
    %34 = vector.broadcast %31 : vector<16x1xf32> to vector<16x128xf32>
    %35 = arith.addf %33, %34 : vector<16x128xf32>
    %36 = math.roundeven %35 : vector<16x128xf32>
    %cst_20 = arith.constant -8.000000e+00 : f32
    %cst_21 = arith.constant 7.000000e+00 : f32
    %37 = vector.broadcast %cst_20 : f32 to vector<16x128xf32>
    %38 = arith.maximumf %37, %36 : vector<16x128xf32>
    %39 = vector.broadcast %cst_21 : f32 to vector<16x128xf32>
    %40 = arith.minimumf %39, %38 : vector<16x128xf32>
    %cst_22 = arith.constant 1.250000e-01 : f32
    %41 = vector.broadcast %cst_22 : f32 to vector<16x128xf32>
    %42 = arith.mulf %40, %41 : vector<16x128xf32>
    %43 = arith.truncf %42 : vector<16x128xf32> to vector<16x128xbf16>
    %c0_23 = arith.constant 0 : index
    %c0_24 = arith.constant 0 : index
    %44 = vector.load %arg6[%c0_23, %c0_24] : memref<16x128xbf16, #tpu.memory_space<vmem>>, vector<16x128xbf16>
    tpu.vector_store %arg6[%c0_23, %c0_24], %43 {strides = array<i32>} : memref<16x128xbf16, #tpu.memory_space<vmem>>, vector<16x128xbf16>,
    return
  }
  func.func @transform_0(%arg0: i32) -> (i32, i32) {
    %c0_i32 = arith.constant 0 : i32
    %c0_i32_0 = arith.constant 0 : i32
    return %arg0, %c0_i32 : i32, i32
  }
  func.func @transform_1(%arg0: i32) -> (i32, i32) {
    %c0_i32 = arith.constant 0 : i32
    %c0_i32_0 = arith.constant 0 : i32
    %c0_i32_1 = arith.constant 0 : i32
    return %c0_i32, %c0_i32_0 : i32, i32
  }
  func.func @transform_2(%arg0: i32) -> (i32, i32) {
    %c0_i32 = arith.constant 0 : i32
    %c0_i32_0 = arith.constant 0 : i32
    %c0_i32_1 = arith.constant 0 : i32
    return %c0_i32, %c0_i32_0 : i32, i32
  }
  func.func @transform_3(%arg0: i32) -> (i32, i32) {
    %c0_i32 = arith.constant 0 : i32
    %c0_i32_0 = arith.constant 0 : i32
    %c0_i32_1 = arith.constant 0 : i32
    return %c0_i32, %c0_i32_0 : i32, i32
  }
  func.func @transform_4(%arg0: i32) -> (i32, i32) {
    %c0_i32 = arith.constant 0 : i32
    %c0_i32_0 = arith.constant 0 : i32
    %c0_i32_1 = arith.constant 0 : i32
    return %c0_i32, %c0_i32_0 : i32, i32
  }
  func.func @transform_5(%arg0: i32) -> (i32, i32) {
    %c0_i32 = arith.constant 0 : i32
    %c0_i32_0 = arith.constant 0 : i32
    return %c0_i32, %arg0 : i32, i32
  }
}

</mosaic_0001>

<llo_original>
// kernel: tpu_custom_call.1
$region0: #{tpu_custom_call.1}
  #allocation0 [shape = 'u32[]', space=smem, size = 0x4, offset = 0x4, fixed_abs, tag = 'smem constant byte address 0x4 - core index']
  #allocation1 [shape = 'u32[144,128]{1,0:T(1,128)}', space=vmem, size = 0x12000, scoped, tag = 'internal scratch']
  %s0 = inlined_call_operand.vmem [shape: f32[128,64], index: 0, kind: input, shape index: {}]
  %s1 = inlined_call_operand.vmem [shape: bf16[32,64], index: 1, kind: input, shape index: {}]
  %s2 = inlined_call_operand.vmem [shape: bf16[32,32], index: 2, kind: input, shape index: {}]
  %s3 = inlined_call_operand.vmem [shape: bf16[16,32], index: 3, kind: input, shape index: {}]
  %s4 = inlined_call_operand.vmem [shape: f32[80,1], index: 4, kind: input, shape index: {}]
  %s5 = inlined_call_operand.hbm [shape: bf16[16,128], index: 5, kind: output, shape index: {}]
  %s6 = sld [smem:[#allocation0]]
  $region30: #{tpu_custom_call.1} parent=0
    _
  %s8 = ssub.s32 1, %s6
  %s9 = scalar_select 0, %s8, %s6
  $region1: #{tpu_custom_call.1} parent=0
    #allocation2 [shape = 'u8[4096]{0}', space=vmem, size = 0x1000, scoped, tag = 'output window, operand 0, single buffered']
    #allocation3 [shape = 's32[1]{0}', space=sflag, size = 0x4, scoped, tag = 'scoped memory for tpu_custom_call.1']
    %10 = vsyncpa [#allocation3], 0
    // Predicated region
    $region2: #{tpu_custom_call.1} parent=1 // pred_check
      _
    $region3: #{tpu_custom_call.1} parent=1 // pred_check_branch
      %12 = sbr.rel (0) target = $region5
    $region4: #{tpu_custom_call.1} parent=1 // pred_region
      _
    $region5: #{tpu_custom_call.1} parent=1 // pred_fallthru
      _
    // Predicated region
    $region6: #{tpu_custom_call.1} parent=1 // pred_check
      _
    $region7: #{tpu_custom_call.1} parent=1 // pred_check_branch
      %14 = sbr.rel (0) target = $region9
    $region8: #{tpu_custom_call.1} parent=1 // pred_region
      _
    $region9: #{tpu_custom_call.1} parent=1 // pred_fallthru
      _
    // Predicated region
    $region10: #{tpu_custom_call.1} parent=1 // pred_check
      _
    $region11: #{tpu_custom_call.1} parent=1 // pred_check_branch
      %16 = sbr.rel (0) target = $region13
    $region12: #{tpu_custom_call.1} parent=1 // pred_region
      _
    $region13: #{tpu_custom_call.1} parent=1 // pred_fallthru
      _
    // Predicated region
    $region14: #{tpu_custom_call.1} parent=1 // pred_check
      _
    $region15: #{tpu_custom_call.1} parent=1 // pred_check_branch
      %18 = sbr.rel (0) target = $region17
    $region16: #{tpu_custom_call.1} parent=1 // pred_region
      _
    $region17: #{tpu_custom_call.1} parent=1 // pred_fallthru
      _
    // Predicated region
    $region18: #{tpu_custom_call.1} parent=1 // pred_check
      _
    $region19: #{tpu_custom_call.1} parent=1 // pred_check_branch
      %20 = sbr.rel (0) target = $region21
    $region20: #{tpu_custom_call.1} parent=1 // pred_region
      _
    $region21: #{tpu_custom_call.1} parent=1 // pred_fallthru
      _
    %v22 = vld [vmem:[%s0] sm:$0xff]
    %v23 = vld [vmem:[%s0 + $0x8] sm:$0xff]
    %v24 = vld [vmem:[%s0 + $0x10] sm:$0xff]
    %v25 = vld [vmem:[%s0 + $0x18] sm:$0xff]
    %v26 = vld [vmem:[%s0 + $0x20] sm:$0xff]
    %v27 = vld [vmem:[%s0 + $0x28] sm:$0xff]
    %v28 = vld [vmem:[%s0 + $0x30] sm:$0xff]
    %v29 = vld [vmem:[%s0 + $0x38] sm:$0xff]
    %v30 = vld [vmem:[%s0 + $0x40] sm:$0xff]
    %v31 = vld [vmem:[%s0 + $0x48] sm:$0xff]
    %v32 = vld [vmem:[%s0 + $0x50] sm:$0xff]
    %v33 = vld [vmem:[%s0 + $0x58] sm:$0xff]
    %v34 = vld [vmem:[%s0 + $0x60] sm:$0xff]
    %v35 = vld [vmem:[%s0 + $0x68] sm:$0xff]
    %v36 = vld [vmem:[%s0 + $0x70] sm:$0xff]
    %v37 = vld [vmem:[%s0 + $0x78] sm:$0xff]
    %v38 = vmul.f32 %v22, 8.0
    %v39 = vmul.f32 %v23, 8.0
    %v40 = vmul.f32 %v24, 8.0
    %v41 = vmul.f32 %v25, 8.0
    %v42 = vmul.f32 %v26, 8.0
    %v43 = vmul.f32 %v27, 8.0
    %v44 = vmul.f32 %v28, 8.0
    %v45 = vmul.f32 %v29, 8.0
    %v46 = vmul.f32 %v30, 8.0
    %v47 = vmul.f32 %v31, 8.0
    %v48 = vmul.f32 %v32, 8.0
    %v49 = vmul.f32 %v33, 8.0
    %v50 = vmul.f32 %v34, 8.0
    %v51 = vmul.f32 %v35, 8.0
    %v52 = vmul.f32 %v36, 8.0
    %v53 = vmul.f32 %v37, 8.0
    %v54 = vround.ne.pseudo %v38
    %v55 = vround.ne.pseudo %v39
    %v56 = vround.ne.pseudo %v40
    %v57 = vround.ne.pseudo %v41
    %v58 = vround.ne.pseudo %v42
    %v59 = vround.ne.pseudo %v43
    %v60 = vround.ne.pseudo %v44
    %v61 = vround.ne.pseudo %v45
    %v62 = vround.ne.pseudo %v46
    %v63 = vround.ne.pseudo %v47
    %v64 = vround.ne.pseudo %v48
    %v65 = vround.ne.pseudo %v49
    %v66 = vround.ne.pseudo %v50
    %v67 = vround.ne.pseudo %v51
    %v68 = vround.ne.pseudo %v52
    %v69 = vround.ne.pseudo %v53
    %v70 = vmax.f32 %v54, -8.0
    %v71 = vmax.f32 %v55, -8.0
    %v72 = vmax.f32 %v56, -8.0
    %v73 = vmax.f32 %v57, -8.0
    %v74 = vmax.f32 %v58, -8.0
    %v75 = vmax.f32 %v59, -8.0
    %v76 = vmax.f32 %v60, -8.0
    %v77 = vmax.f32 %v61, -8.0
    %v78 = vmax.f32 %v62, -8.0
    %v79 = vmax.f32 %v63, -8.0
    %v80 = vmax.f32 %v64, -8.0
    %v81 = vmax.f32 %v65, -8.0
    %v82 = vmax.f32 %v66, -8.0
    %v83 = vmax.f32 %v67, -8.0
    %v84 = vmax.f32 %v68, -8.0
    %v85 = vmax.f32 %v69, -8.0
    %v86 = vmin.f32 %v70, 7.0
    %v87 = vmin.f32 %v71, 7.0
    %v88 = vmin.f32 %v72, 7.0
    %v89 = vmin.f32 %v73, 7.0
    %v90 = vmin.f32 %v74, 7.0
    %v91 = vmin.f32 %v75, 7.0
    %v92 = vmin.f32 %v76, 7.0
    %v93 = vmin.f32 %v77, 7.0
    %v94 = vmin.f32 %v78, 7.0
    %v95 = vmin.f32 %v79, 7.0
    %v96 = vmin.f32 %v80, 7.0
    %v97 = vmin.f32 %v81, 7.0
    %v98 = vmin.f32 %v82, 7.0
    %v99 = vmin.f32 %v83, 7.0
    %v100 = vmin.f32 %v84, 7.0
    %v101 = vmin.f32 %v85, 7.0
    %v102 = vpack.c.bf16 %v87, %v86
    %v103 = vpack.c.bf16 %v89, %v88
    %v104 = vpack.c.bf16 %v91, %v90
    %v105 = vpack.c.bf16 %v93, %v92
    %v106 = vpack.c.bf16 %v95, %v94
    %v107 = vpack.c.bf16 %v97, %v96
    %v108 = vpack.c.bf16 %v99, %v98
    %v109 = vpack.c.bf16 %v101, %v100
    %v110 = vld [vmem:[%s4] sm:$0xff]
    %v111 = vld [vmem:[%s4 + $0x8] sm:$0xff]
    %v112 = vld [vmem:[%s4 + $0x10] sm:$0xff]
    %v113 = vld [vmem:[%s4 + $0x18] sm:$0xff]
    %v114 = vld [vmem:[%s1] sm:$0xf]
    %v115 = vld [vmem:[%s1 + $0x4] sm:$0xf]
    %v116 = vld [vmem:[%s1 + $0x8] sm:$0xf]
    %v117 = vld [vmem:[%s1 + $0xc] sm:$0xf]
    %119 = vset.pattern.permute.xlu0 0
    %120 = vperm.xlu0 %119, %v110
    %v121 = vpop.permute.xlu0 %120
    %124 = vset.pattern.permute.xlu0 0
    %125 = vperm.xlu0 %124, %v111
    %v126 = vpop.permute.xlu0 %125
    %129 = vset.pattern.permute.xlu0 0
    %130 = vperm.xlu0 %129, %v112
    %v131 = vpop.permute.xlu0 %130
    %134 = vset.pattern.permute.xlu0 0
    %135 = vperm.xlu0 %134, %v113
    %v136 = vpop.permute.xlu0 %135
    %v142 = vunpack.c.l.b16 %v114
    %v143 = vunpack.c.l.b16 %v115
    %v144 = vunpack.c.l.b16 %v116
    %v145 = vunpack.c.l.b16 %v117
    %v146 = vpack.c.b16 %v143, %v142
    %v147 = vpack.c.b16 %v145, %v144
    %vm148 = vcmask 523264
    %v150 = vsel %vm148, %v146, 0
    %v153 = vsel %vm148, %v147, 0
    %v156 = vsel %vm148, %v102, 0
    %v159 = vsel %vm148, %v103, 0
    %v162 = vsel %vm148, %v104, 0
    %v165 = vsel %vm148, %v105, 0
    %v168 = vsel %vm148, %v106, 0
    %v171 = vsel %vm148, %v107, 0
    %v174 = vsel %vm148, %v108, 0
    %v177 = vsel %vm148, %v109, 0
    %179 = vmatprep.subr.bf16.mxu0 0
    %180 = vmatpush1.bf16.xpose.msra.mxu0 %v156
    %181 = vmatprep.subr.bf16.mxu0 0
    %182 = vmatpush1.bf16.xpose.msra.mxu0 %v159
    %183 = vmatprep.subr.bf16.mxu0 0
    %184 = vmatpush1.bf16.xpose.msra.mxu0 %v162
    %185 = vmatprep.subr.bf16.mxu0 0
    %186 = vmatpush1.bf16.xpose.msra.mxu0 %v165
    %187 = vmatprep.subr.bf16.mxu0 0
    %188 = vmatpush1.bf16.xpose.msra.mxu0 %v168
    %189 = vmatprep.subr.bf16.mxu0 0
    %190 = vmatpush1.bf16.xpose.msra.mxu0 %v171
    %191 = vmatprep.subr.bf16.mxu0 0
    %192 = vmatpush1.bf16.xpose.msra.mxu0 %v174
    %193 = vmatprep.subr.bf16.mxu0 0
    %194 = vmatpush1.bf16.xpose.msra.mxu0 %v177
    %195 = vmatprep.subr.bf16.mxu0 0
    %196 = vmatpush1.bf16.xpose.msra.mxu0 0
    %197 = vmatprep.subr.bf16.mxu0 0
    %198 = vmatpush1.bf16.xpose.msra.mxu0 0
    %199 = vmatprep.subr.bf16.mxu0 0
    %200 = vmatpush1.bf16.xpose.msra.mxu0 0
    %201 = vmatprep.subr.bf16.mxu0 0
    %202 = vmatpush1.bf16.xpose.msra.mxu0 0
    %203 = vmatprep.subr.bf16.mxu0 0
    %204 = vmatpush1.bf16.xpose.msra.mxu0 0
    %205 = vmatprep.subr.bf16.mxu0 0
    %206 = vmatpush1.bf16.xpose.msra.mxu0 0
    %207 = vmatprep.subr.bf16.mxu0 0
    %208 = vmatpush1.bf16.xpose.msra.mxu0 0
    %209 = vmatprep.subr.bf16.mxu0 0
    %210 = vmatpush1.bf16.xpose.msra.mxu0 0
    %211 = vmatprep.mubr.bf16.mxu0 0
    %212 = vmatmul.mubr.bf16.gmra.mrb[0].mxu0 %v150
    %v213 = vpop.f32.mrb[0].mxu0
    %v214 = vadd.f32 %v121, %v213
    %v215 = vpop.f32.mrb[0].mxu0
    %v216 = vpop.f32.mrb[0].mxu0
    %v217 = vadd.f32 %v126, %v216
    %v218 = vpop.f32.mrb[0].mxu0
    %219 = vmatprep.mubr.bf16.mxu0 0
    %220 = vmatmul.mubr.bf16.gmra.mrb[0].mxu0 %v153
    %v221 = vpop.f32.mrb[0].mxu0
    %v222 = vadd.f32 %v131, %v221
    %v223 = vpop.f32.mrb[0].mxu0
    %v224 = vpop.f32.mrb[0].mxu0
    %v225 = vadd.f32 %v136, %v224
    %v226 = vpop.f32.mrb[0].mxu0
    %227 = vdwg.mxu0
    %v228 = vround.ne.pseudo %v214
    %v229 = vround.ne.pseudo %v217
    %v230 = vround.ne.pseudo %v222
    %v231 = vround.ne.pseudo %v225
    %v232 = vmax.f32 %v228, 0.0
    %v233 = vmax.f32 %v229, 0.0
    %v234 = vmax.f32 %v230, 0.0
    %v235 = vmax.f32 %v231, 0.0
    %v236 = vmin.f32 %v232, 3.0
    %v237 = vmin.f32 %v233, 3.0
    %v238 = vmin.f32 %v234, 3.0
    %v239 = vmin.f32 %v235, 3.0
    %v240 = vpack.c.bf16 %v237, %v236
    %v241 = vpack.c.bf16 %v239, %v238
    %v242 = vld [vmem:[%s4 + $0x20] sm:$0xff]
    %v243 = vld [vmem:[%s4 + $0x28] sm:$0xff]
    %v244 = vld [vmem:[%s4 + $0x30] sm:$0xff]
    %v245 = vld [vmem:[%s4 + $0x38] sm:$0xff]
    %v246 = vld [vmem:[%s2] sm:$0xf]
    %v247 = vld [vmem:[%s2 + $0x4] sm:$0xf]
    %v248 = vld [vmem:[%s2 + $0x8] sm:$0xf]
    %v249 = vld [vmem:[%s2 + $0xc] sm:$0xf]
    %251 = vset.pattern.permute.xlu0 0
    %252 = vperm.xlu0 %251, %v242
    %v253 = vpop.permute.xlu0 %252
    %256 = vset.pattern.permute.xlu0 0
    %257 = vperm.xlu0 %256, %v243
    %v258 = vpop.permute.xlu0 %257
    %261 = vset.pattern.permute.xlu0 0
    %262 = vperm.xlu0 %261, %v244
    %v263 = vpop.permute.xlu0 %262
    %266 = vset.pattern.permute.xlu0 0
    %267 = vperm.xlu0 %266, %v245
    %v268 = vpop.permute.xlu0 %267
    %v274 = vunpack.c.l.b16 %v246
    %v275 = vunpack.c.l.b16 %v247
    %v276 = vunpack.c.l.b16 %v248
    %v277 = vunpack.c.l.b16 %v249
    %v278 = vpack.c.b16 %v275, %v274
    %v279 = vpack.c.b16 %v277, %v276
    %vm280 = vcmask 261120
    %v282 = vsel %vm280, %v278, 0
    %v285 = vsel %vm280, %v279, 0
    %287 = vmatprep.subr.bf16.mxu0 0
    %288 = vmatpush1.bf16.msra.mxu0 %v240
    %289 = vmatprep.subr.bf16.mxu0 0
    %290 = vmatpush1.bf16.msra.mxu0 %v241
    %291 = vmatprep.subr.bf16.mxu0 0
    %292 = vmatpush1.bf16.msra.mxu0 0
    %293 = vmatprep.subr.bf16.mxu0 0
    %294 = vmatpush1.bf16.msra.mxu0 0
    %295 = vmatprep.subr.bf16.mxu0 0
    %296 = vmatpush1.bf16.msra.mxu0 0
    %297 = vmatprep.subr.bf16.mxu0 0
    %298 = vmatpush1.bf16.msra.mxu0 0
    %299 = vmatprep.subr.bf16.mxu0 0
    %300 = vmatpush1.bf16.msra.mxu0 0
    %301 = vmatprep.subr.bf16.mxu0 0
    %302 = vmatpush1.bf16.msra.mxu0 0
    %303 = vmatprep.subr.bf16.mxu0 0
    %304 = vmatpush1.bf16.msra.mxu0 0
    %305 = vmatprep.subr.bf16.mxu0 0
    %306 = vmatpush1.bf16.msra.mxu0 0
    %307 = vmatprep.subr.bf16.mxu0 0
    %308 = vmatpush1.bf16.msra.mxu0 0
    %309 = vmatprep.subr.bf16.mxu0 0
    %310 = vmatpush1.bf16.msra.mxu0 0
    %311 = vmatprep.subr.bf16.mxu0 0
    %312 = vmatpush1.bf16.msra.mxu0 0
    %313 = vmatprep.subr.bf16.mxu0 0
    %314 = vmatpush1.bf16.msra.mxu0 0
    %315 = vmatprep.subr.bf16.mxu0 0
    %316 = vmatpush1.bf16.msra.mxu0 0
    %317 = vmatprep.subr.bf16.mxu0 0
    %318 = vmatpush1.bf16.msra.mxu0 0
    %319 = vmatprep.mubr.bf16.mxu0 0
    %320 = vmatmul.mubr.bf16.gmra.mrb[0].mxu0 %v282
    %v321 = vpop.f32.mrb[0].mxu0
    %v322 = vadd.f32 %v253, %v321
    %v323 = vpop.f32.mrb[0].mxu0
    %v324 = vpop.f32.mrb[0].mxu0
    %v325 = vadd.f32 %v258, %v324
    %v326 = vpop.f32.mrb[0].mxu0
    %327 = vmatprep.mubr.bf16.mxu0 0
    %328 = vmatmul.mubr.bf16.gmra.mrb[0].mxu0 %v285
    %v329 = vpop.f32.mrb[0].mxu0
    %v330 = vadd.f32 %v263, %v329
    %v331 = vpop.f32.mrb[0].mxu0
    %v332 = vpop.f32.mrb[0].mxu0
    %v333 = vadd.f32 %v268, %v332
    %v334 = vpop.f32.mrb[0].mxu0
    %335 = vdwg.mxu0
    %v336 = vround.ne.pseudo %v322
    %v337 = vround.ne.pseudo %v325
    %v338 = vround.ne.pseudo %v330
    %v339 = vround.ne.pseudo %v333
    %v340 = vmax.f32 %v336, 0.0
    %v341 = vmax.f32 %v337, 0.0
    %v342 = vmax.f32 %v338, 0.0
    %v343 = vmax.f32 %v339, 0.0
    %v344 = vmin.f32 %v340, 3.0
    %v345 = vmin.f32 %v341, 3.0
    %v346 = vmin.f32 %v342, 3.0
    %v347 = vmin.f32 %v343, 3.0
    %v348 = vpack.c.bf16 %v345, %v344
    %v349 = vpack.c.bf16 %v347, %v346
    %v350 = vld [vmem:[%s4 + $0x40] sm:$0xff]
    %v351 = vld [vmem:[%s4 + $0x48] sm:$0xff]
    %v352 = vld [vmem:[%s3] sm:$0xf]
    %v353 = vld [vmem:[%s3 + $0x4] sm:$0xf]
    %355 = vset.pattern.permute.xlu0 0
    %356 = vperm.xlu0 %355, %v350
    %v357 = vpop.permute.xlu0 %356
    %360 = vset.pattern.permute.xlu0 0
    %361 = vperm.xlu0 %360, %v351
    %v362 = vpop.permute.xlu0 %361
    %v366 = vunpack.c.l.b16 %v352
    %v367 = vunpack.c.l.b16 %v353
    %v368 = vpack.c.b16 %v367, %v366
    %v370 = vsel %vm280, %v368, 0
    %372 = vmatprep.subr.bf16.mxu0 0
    %373 = vmatpush1.bf16.msra.mxu0 %v348
    %374 = vmatprep.subr.bf16.mxu0 0
    %375 = vmatpush1.bf16.msra.mxu0 %v349
    %376 = vmatprep.subr.bf16.mxu0 0
    %377 = vmatpush1.bf16.msra.mxu0 0
    %378 = vmatprep.subr.bf16.mxu0 0
    %379 = vmatpush1.bf16.msra.mxu0 0
    %380 = vmatprep.subr.bf16.mxu0 0
    %381 = vmatpush1.bf16.msra.mxu0 0
    %382 = vmatprep.subr.bf16.mxu0 0
    %383 = vmatpush1.bf16.msra.mxu0 0
    %384 = vmatprep.subr.bf16.mxu0 0
    %385 = vmatpush1.bf16.msra.mxu0 0
    %386 = vmatprep.subr.bf16.mxu0 0
    %387 = vmatpush1.bf16.msra.mxu0 0
    %388 = vmatprep.subr.bf16.mxu0 0
    %389 = vmatpush1.bf16.msra.mxu0 0
    %390 = vmatprep.subr.bf16.mxu0 0
    %391 = vmatpush1.bf16.msra.mxu0 0
    %392 = vmatprep.subr.bf16.mxu0 0
    %393 = vmatpush1.bf16.msra.mxu0 0
    %394 = vmatprep.subr.bf16.mxu0 0
    %395 = vmatpush1.bf16.msra.mxu0 0
    %396 = vmatprep.subr.bf16.mxu0 0
    %397 = vmatpush1.bf16.msra.mxu0 0
    %398 = vmatprep.subr.bf16.mxu0 0
    %399 = vmatpush1.bf16.msra.mxu0 0
    %400 = vmatprep.subr.bf16.mxu0 0
    %401 = vmatpush1.bf16.msra.mxu0 0
    %402 = vmatprep.subr.bf16.mxu0 0
    %403 = vmatpush1.bf16.msra.mxu0 0
    %404 = vmatprep.mubr.bf16.mxu0 0
    %405 = vmatmul.mubr.bf16.gmra.mrb[0].mxu0 %v370
    %v406 = vpop.f32.mrb[0].mxu0
    %v407 = vadd.f32 %v357, %v406
    %v408 = vpop.f32.mrb[0].mxu0
    %v409 = vpop.f32.mrb[0].mxu0
    %v410 = vadd.f32 %v362, %v409
    %v411 = vpop.f32.mrb[0].mxu0
    %412 = vdwg.mxu0
    %v413 = vround.ne.pseudo %v407
    %v414 = vround.ne.pseudo %v410
    %v415 = vmax.f32 %v413, -8.0
    %v416 = vmax.f32 %v414, -8.0
    %v417 = vmin.f32 %v415, 7.0
    %v418 = vmin.f32 %v416, 7.0
    %v419 = vmul.f32 %v417, 0.125
    %v420 = vmul.f32 %v418, 0.125
    %v421 = vpack.c.bf16 %v420, %v419
    %v423 = vunpack.c.l.b16 %v421
    %v424 = vunpack.c.h.b16 %v421
    %v425 = vpack.c.b16 %v423, %v423
    %v426 = vpack.c.b16 %v424, %v424
    %429 = vst [vmem:[#allocation2] sm:$0xf] %v425
    %430 = vst [vmem:[#allocation2 + $0x4] sm:$0xf] %v426
    // Predicated region
    $region22: #{tpu_custom_call.1} parent=1 // pred_check
      _
    $region23: #{tpu_custom_call.1} parent=1 // pred_check_branch
      %432 = sbr.rel (0) target = $region25
    $region24: #{tpu_custom_call.1} parent=1 // pred_region
      %s434 = ssub.s32 128, 128
      %435 = vsyncadd [#allocation3], %s434
      %s436 = sshll.u32 [#allocation2], 4
      %s437 = int_to_ptr.vmem [resolvable:$true] %s436
      %442 = dma.vmem_to_hbm [thread:$0]  %s437, 128, %s5, [#allocation3], 64, 64, 4
    $region25: #{tpu_custom_call.1} parent=1 // pred_fallthru
      _
    // Predicated region
    $region26: #{tpu_custom_call.1} parent=1 // pred_check
      _
    $region27: #{tpu_custom_call.1} parent=1 // pred_check_branch
      %444 = sbr.rel (0) target = $region29
    $region28: #{tpu_custom_call.1} parent=1 // pred_region
      %445 = dma.done [#allocation3], 128
    $region29: #{tpu_custom_call.1} parent=1 // pred_fallthru
      _
    %446 = vsyncpa [#allocation3], 1

// kernel: tpu_custom_call.1
$region0: #{tpu_custom_call.1}
  #allocation0 [shape = 'u32[]', space=smem, size = 0x4, offset = 0x4, fixed_abs, tag = 'smem constant byte address 0x4 - core index']
  #allocation1 [shape = 'u32[144,128]{1,0:T(1,128)}', space=vmem, size = 0x12000, scoped, tag = 'internal scratch']
  %s0 = inlined_call_operand.vmem [shape: f32[128,64], index: 0, kind: input, shape index: {}]
  %s1 = inlined_call_operand.vmem [shape: bf16[32,64], index: 1, kind: input, shape index: {}]
  %s2 = inlined_call_operand.vmem [shape: bf16[32,32], index: 2, kind: input, shape index: {}]
  %s3 = inlined_call_operand.vmem [shape: bf16[16,32], index: 3, kind: input, shape index: {}]
  %s4 = inlined_call_operand.vmem [shape: f32[80,1], index: 4, kind: input, shape index: {}]
  %s5 = inlined_call_operand.hbm [shape: bf16[16,128], index: 5, kind: output, shape index: {}]
  %s6 = sld [smem:[#allocation0]]
  $region30: #{tpu_custom_call.1} parent=0
    _
  %s8 = ssub.s32 1, %s6
  %s9 = scalar_select 0, %s8, %s6
  $region1: #{tpu_custom_call.1} parent=0
    #allocation2 [shape = 'u8[4096]{0}', space=vmem, size = 0x1000, scoped, tag = 'output window, operand 0, single buffered']
    #allocation3 [shape = 's32[1]{0}', space=sflag, size = 0x4, scoped, tag = 'scoped memory for tpu_custom_call.1']
    %10 = vsyncpa [#allocation3], 0
    // Predicated region
    $region2: #{tpu_custom_call.1} parent=1 // pred_check
      _
    $region3: #{tpu_custom_call.1} parent=1 // pred_check_branch
      %12 = sbr.rel (0) target = $region5
    $region4: #{tpu_custom_call.1} parent=1 // pred_region
      _
    $region5: #{tpu_custom_call.1} parent=1 // pred_fallthru
      _
    // Predicated region
    $region6: #{tpu_custom_call.1} parent=1 // pred_check
      _
    $region7: #{tpu_custom_call.1} parent=1 // pred_check_branch
      %14 = sbr.rel (0) target = $region9
    $region8: #{tpu_custom_call.1} parent=1 // pred_region
      _
    $region9: #{tpu_custom_call.1} parent=1 // pred_fallthru
      _
    // Predicated region
    $region10: #{tpu_custom_call.1} parent=1 // pred_check
      _
    $region11: #{tpu_custom_call.1} parent=1 // pred_check_branch
      %16 = sbr.rel (0) target = $region13
    $region12: #{tpu_custom_call.1} parent=1 // pred_region
      _
    $region13: #{tpu_custom_call.1} parent=1 // pred_fallthru
      _
    // Predicated region
    $region14: #{tpu_custom_call.1} parent=1 // pred_check
      _
    $region15: #{tpu_custom_call.1} parent=1 // pred_check_branch
      %18 = sbr.rel (0) target = $region17
    $region16: #{tpu_custom_call.1} parent=1 // pred_region
      _
    $region17: #{tpu_custom_call.1} parent=1 // pred_fallthru
      _
    // Predicated region
    $region18: #{tpu_custom_call.1} parent=1 // pred_check
      _
    $region19: #{tpu_custom_call.1} parent=1 // pred_check_branch
      %20 = sbr.rel (0) target = $region21
    $region20: #{tpu_custom_call.1} parent=1 // pred_region
      _
    $region21: #{tpu_custom_call.1} parent=1 // pred_fallthru
      _
    %v22 = vld [vmem:[%s0] sm:$0xff]
    %v23 = vld [vmem:[%s0 + $0x8] sm:$0xff]
    %v24 = vld [vmem:[%s0 + $0x10] sm:$0xff]
    %v25 = vld [vmem:[%s0 + $0x18] sm:$0xff]
    %v26 = vld [vmem:[%s0 + $0x20] sm:$0xff]
    %v27 = vld [vmem:[%s0 + $0x28] sm:$0xff]
    %v28 = vld [vmem:[%s0 + $0x30] sm:$0xff]
    %v29 = vld [vmem:[%s0 + $0x38] sm:$0xff]
    %v30 = vld [vmem:[%s0 + $0x40] sm:$0xff]
    %v31 = vld [vmem:[%s0 + $0x48] sm:$0xff]
    %v32 = vld [vmem:[%s0 + $0x50] sm:$0xff]
    %v33 = vld [vmem:[%s0 + $0x58] sm:$0xff]
    %v34 = vld [vmem:[%s0 + $0x60] sm:$0xff]
    %v35 = vld [vmem:[%s0 + $0x68] sm:$0xff]
    %v36 = vld [vmem:[%s0 + $0x70] sm:$0xff]
    %v37 = vld [vmem:[%s0 + $0x78] sm:$0xff]
    %v38 = vmul.f32 %v22, 8.0
    %v39 = vmul.f32 %v23, 8.0
    %v40 = vmul.f32 %v24, 8.0
    %v41 = vmul.f32 %v25, 8.0
    %v42 = vmul.f32 %v26, 8.0
    %v43 = vmul.f32 %v27, 8.0
    %v44 = vmul.f32 %v28, 8.0
    %v45 = vmul.f32 %v29, 8.0
    %v46 = vmul.f32 %v30, 8.0
    %v47 = vmul.f32 %v31, 8.0
    %v48 = vmul.f32 %v32, 8.0
    %v49 = vmul.f32 %v33, 8.0
    %v50 = vmul.f32 %v34, 8.0
    %v51 = vmul.f32 %v35, 8.0
    %v52 = vmul.f32 %v36, 8.0
    %v53 = vmul.f32 %v37, 8.0
    %v54 = vround.ne.pseudo %v38
    %v55 = vround.ne.pseudo %v39
    %v56 = vround.ne.pseudo %v40
    %v57 = vround.ne.pseudo %v41
    %v58 = vround.ne.pseudo %v42
    %v59 = vround.ne.pseudo %v43
    %v60 = vround.ne.pseudo %v44
    %v61 = vround.ne.pseudo %v45
    %v62 = vround.ne.pseudo %v46
    %v63 = vround.ne.pseudo %v47
    %v64 = vround.ne.pseudo %v48
    %v65 = vround.ne.pseudo %v49
    %v66 = vround.ne.pseudo %v50
    %v67 = vround.ne.pseudo %v51
    %v68 = vround.ne.pseudo %v52
    %v69 = vround.ne.pseudo %v53
    %v70 = vmax.f32 %v54, -8.0
    %v71 = vmax.f32 %v55, -8.0
    %v72 = vmax.f32 %v56, -8.0
    %v73 = vmax.f32 %v57, -8.0
    %v74 = vmax.f32 %v58, -8.0
    %v75 = vmax.f32 %v59, -8.0
    %v76 = vmax.f32 %v60, -8.0
    %v77 = vmax.f32 %v61, -8.0
    %v78 = vmax.f32 %v62, -8.0
    %v79 = vmax.f32 %v63, -8.0
    %v80 = vmax.f32 %v64, -8.0
    %v81 = vmax.f32 %v65, -8.0
    %v82 = vmax.f32 %v66, -8.0
    %v83 = vmax.f32 %v67, -8.0
    %v84 = vmax.f32 %v68, -8.0
    %v85 = vmax.f32 %v69, -8.0
    %v86 = vmin.f32 %v70, 7.0
    %v87 = vmin.f32 %v71, 7.0
    %v88 = vmin.f32 %v72, 7.0
    %v89 = vmin.f32 %v73, 7.0
    %v90 = vmin.f32 %v74, 7.0
    %v91 = vmin.f32 %v75, 7.0
    %v92 = vmin.f32 %v76, 7.0
    %v93 = vmin.f32 %v77, 7.0
    %v94 = vmin.f32 %v78, 7.0
    %v95 = vmin.f32 %v79, 7.0
    %v96 = vmin.f32 %v80, 7.0
    %v97 = vmin.f32 %v81, 7.0
    %v98 = vmin.f32 %v82, 7.0
    %v99 = vmin.f32 %v83, 7.0
    %v100 = vmin.f32 %v84, 7.0
    %v101 = vmin.f32 %v85, 7.0
    %v102 = vpack.c.bf16 %v87, %v86
    %v103 = vpack.c.bf16 %v89, %v88
    %v104 = vpack.c.bf16 %v91, %v90
    %v105 = vpack.c.bf16 %v93, %v92
    %v106 = vpack.c.bf16 %v95, %v94
    %v107 = vpack.c.bf16 %v97, %v96
    %v108 = vpack.c.bf16 %v99, %v98
    %v109 = vpack.c.bf16 %v101, %v100
    %v110 = vld [vmem:[%s4] sm:$0xff]
    %v111 = vld [vmem:[%s4 + $0x8] sm:$0xff]
    %v112 = vld [vmem:[%s4 + $0x10] sm:$0xff]
    %v113 = vld [vmem:[%s4 + $0x18] sm:$0xff]
    %v114 = vld [vmem:[%s1] sm:$0xf]
    %v115 = vld [vmem:[%s1 + $0x4] sm:$0xf]
    %v116 = vld [vmem:[%s1 + $0x8] sm:$0xf]
    %v117 = vld [vmem:[%s1 + $0xc] sm:$0xf]
    %119 = vset.pattern.permute.xlu0 0
    %120 = vperm.xlu0 %119, %v110
    %v121 = vpop.permute.xlu0 %120
    %124 = vset.pattern.permute.xlu0 0
    %125 = vperm.xlu0 %124, %v111
    %v126 = vpop.permute.xlu0 %125
    %129 = vset.pattern.permute.xlu0 0
    %130 = vperm.xlu0 %129, %v112
    %v131 = vpop.permute.xlu0 %130
    %134 = vset.pattern.permute.xlu0 0
    %135 = vperm.xlu0 %134, %v113
    %v136 = vpop.permute.xlu0 %135
    %v142 = vunpack.c.l.b16 %v114
    %v143 = vunpack.c.l.b16 %v115
    %v144 = vunpack.c.l.b16 %v116
    %v145 = vunpack.c.l.b16 %v117
    %v146 = vpack.c.b16 %v143, %v142
    %v147 = vpack.c.b16 %v145, %v144
    %vm148 = vcmask 523264
    %v150 = vsel %vm148, %v146, 0
    %v153 = vsel %vm148, %v147, 0
    %v156 = vsel %vm148, %v102, 0
    %v159 = vsel %vm148, %v103, 0
    %v162 = vsel %vm148, %v104, 0
    %v165 = vsel %vm148, %v105, 0
    %v168 = vsel %vm148, %v106, 0
    %v171 = vsel %vm148, %v107, 0
    %v174 = vsel %vm148, %v108, 0
    %v177 = vsel %vm148, %v109, 0
    %179 = vmatprep.subr.bf16.mxu0 0
    %180 = vmatpush1.bf16.xpose.msra.mxu0 %v156
    %181 = vmatprep.subr.bf16.mxu0 0
    %182 = vmatpush1.bf16.xpose.msra.mxu0 %v159
    %183 = vmatprep.subr.bf16.mxu0 0
    %184 = vmatpush1.bf16.xpose.msra.mxu0 %v162
    %185 = vmatprep.subr.bf16.mxu0 0
    %186 = vmatpush1.bf16.xpose.msra.mxu0 %v165
    %187 = vmatprep.subr.bf16.mxu0 0
    %188 = vmatpush1.bf16.xpose.msra.mxu0 %v168
    %189 = vmatprep.subr.bf16.mxu0 0
    %190 = vmatpush1.bf16.xpose.msra.mxu0 %v171
    %191 = vmatprep.subr.bf16.mxu0 0
    %192 = vmatpush1.bf16.xpose.msra.mxu0 %v174
    %193 = vmatprep.subr.bf16.mxu0 0
    %194 = vmatpush1.bf16.xpose.msra.mxu0 %v177
    %195 = vmatprep.subr.bf16.mxu0 0
    %196 = vmatpush1.bf16.xpose.msra.mxu0 0
    %197 = vmatprep.subr.bf16.mxu0 0
    %198 = vmatpush1.bf16.xpose.msra.mxu0 0
    %199 = vmatprep.subr.bf16.mxu0 0
    %200 = vmatpush1.bf16.xpose.msra.mxu0 0
    %201 = vmatprep.subr.bf16.mxu0 0
    %202 = vmatpush1.bf16.xpose.msra.mxu0 0
    %203 = vmatprep.subr.bf16.mxu0 0
    %204 = vmatpush1.bf16.xpose.msra.mxu0 0
    %205 = vmatprep.subr.bf16.mxu0 0
    %206 = vmatpush1.bf16.xpose.msra.mxu0 0
    %207 = vmatprep.subr.bf16.mxu0 0
    %208 = vmatpush1.bf16.xpose.msra.mxu0 0
    %209 = vmatprep.subr.bf16.mxu0 0
    %210 = vmatpush1.bf16.xpose.msra.mxu0 0
    %211 = vmatprep.mubr.bf16.mxu0 0
    %212 = vmatmul.mubr.bf16.gmra.mrb[0].mxu0 %v150
    %v213 = vpop.f32.mrb[0].mxu0
    %v214 = vadd.f32 %v121, %v213
    %v215 = vpop.f32.mrb[0].mxu0
    %v216 = vpop.f32.mrb[0].mxu0
    %v217 = vadd.f32 %v126, %v216
    %v218 = vpop.f32.mrb[0].mxu0
    %219 = vmatprep.mubr.bf16.mxu0 0
    %220 = vmatmul.mubr.bf16.gmra.mrb[0].mxu0 %v153
    %v221 = vpop.f32.mrb[0].mxu0
    %v222 = vadd.f32 %v131, %v221
    %v223 = vpop.f32.mrb[0].mxu0
    %v224 = vpop.f32.mrb[0].mxu0
    %v225 = vadd.f32 %v136, %v224
    %v226 = vpop.f32.mrb[0].mxu0
    %227 = vdwg.mxu0
    %v228 = vround.ne.pseudo %v214
    %v229 = vround.ne.pseudo %v217
    %v230 = vround.ne.pseudo %v222
    %v231 = vround.ne.pseudo %v225
    %v232 = vmax.f32 %v228, 0.0
    %v233 = vmax.f32 %v229, 0.0
    %v234 = vmax.f32 %v230, 0.0
    %v235 = vmax.f32 %v231, 0.0
    %v236 = vmin.f32 %v232, 3.0
    %v237 = vmin.f32 %v233, 3.0
    %v238 = vmin.f32 %v234, 3.0
    %v239 = vmin.f32 %v235, 3.0
    %v240 = vpack.c.bf16 %v237, %v236
    %v241 = vpack.c.bf16 %v239, %v238
    %v242 = vld [vmem:[%s4 + $0x20] sm:$0xff]
    %v243 = vld [vmem:[%s4 + $0x28] sm:$0xff]
    %v244 = vld [vmem:[%s4 + $0x30] sm:$0xff]
    %v245 = vld [vmem:[%s4 + $0x38] sm:$0xff]
    %v246 = vld [vmem:[%s2] sm:$0xf]
    %v247 = vld [vmem:[%s2 + $0x4] sm:$0xf]
    %v248 = vld [vmem:[%s2 + $0x8] sm:$0xf]
    %v249 = vld [vmem:[%s2 + $0xc] sm:$0xf]
    %251 = vset.pattern.permute.xlu0 0
    %252 = vperm.xlu0 %251, %v242
    %v253 = vpop.permute.xlu0 %252
    %256 = vset.pattern.permute.xlu0 0
    %257 = vperm.xlu0 %256, %v243
    %v258 = vpop.permute.xlu0 %257
    %261 = vset.pattern.permute.xlu0 0
    %262 = vperm.xlu0 %261, %v244
    %v263 = vpop.permute.xlu0 %262
    %266 = vset.pattern.permute.xlu0 0
    %267 = vperm.xlu0 %266, %v245
    %v268 = vpop.permute.xlu0 %267
    %v274 = vunpack.c.l.b16 %v246
    %v275 = vunpack.c.l.b16 %v247
    %v276 = vunpack.c.l.b16 %v248
    %v277 = vunpack.c.l.b16 %v249
    %v278 = vpack.c.b16 %v275, %v274
    %v279 = vpack.c.b16 %v277, %v276
    %vm280 = vcmask 261120
    %v282 = vsel %vm280, %v278, 0
    %v285 = vsel %vm280, %v279, 0
    %287 = vmatprep.subr.bf16.mxu0 0
    %288 = vmatpush1.bf16.msra.mxu0 %v240
    %289 = vmatprep.subr.bf16.mxu0 0
    %290 = vmatpush1.bf16.msra.mxu0 %v241
    %291 = vmatprep.subr.bf16.mxu0 0
    %292 = vmatpush1.bf16.msra.mxu0 0
    %293 = vmatprep.subr.bf16.mxu0 0
    %294 = vmatpush1.bf16.msra.mxu0 0
    %295 = vmatprep.subr.bf16.mxu0 0
    %296 = vmatpush1.bf16.msra.mxu0 0
    %297 = vmatprep.subr.bf16.mxu0 0
    %298 = vmatpush1.bf16.msra.mxu0 0
    %299 = vmatprep.subr.bf16.mxu0 0
    %300 = vmatpush1.bf16.msra.mxu0 0
    %301 = vmatprep.subr.bf16.mxu0 0
    %302 = vmatpush1.bf16.msra.mxu0 0
    %303 = vmatprep.subr.bf16.mxu0 0
    %304 = vmatpush1.bf16.msra.mxu0 0
    %305 = vmatprep.subr.bf16.mxu0 0
    %306 = vmatpush1.bf16.msra.mxu0 0
    %307 = vmatprep.subr.bf16.mxu0 0
    %308 = vmatpush1.bf16.msra.mxu0 0
    %309 = vmatprep.subr.bf16.mxu0 0
    %310 = vmatpush1.bf16.msra.mxu0 0
    %311 = vmatprep.subr.bf16.mxu0 0
    %312 = vmatpush1.bf16.msra.mxu0 0
    %313 = vmatprep.subr.bf16.mxu0 0
    %314 = vmatpush1.bf16.msra.mxu0 0
    %315 = vmatprep.subr.bf16.mxu0 0
    %316 = vmatpush1.bf16.msra.mxu0 0
    %317 = vmatprep.subr.bf16.mxu0 0
    %318 = vmatpush1.bf16.msra.mxu0 0
    %319 = vmatprep.mubr.bf16.mxu0 0
    %320 = vmatmul.mubr.bf16.gmra.mrb[0].mxu0 %v282
    %v321 = vpop.f32.mrb[0].mxu0
    %v322 = vadd.f32 %v253, %v321
    %v323 = vpop.f32.mrb[0].mxu0
    %v324 = vpop.f32.mrb[0].mxu0
    %v325 = vadd.f32 %v258, %v324
    %v326 = vpop.f32.mrb[0].mxu0
    %327 = vmatprep.mubr.bf16.mxu0 0
    %328 = vmatmul.mubr.bf16.gmra.mrb[0].mxu0 %v285
    %v329 = vpop.f32.mrb[0].mxu0
    %v330 = vadd.f32 %v263, %v329
    %v331 = vpop.f32.mrb[0].mxu0
    %v332 = vpop.f32.mrb[0].mxu0
    %v333 = vadd.f32 %v268, %v332
    %v334 = vpop.f32.mrb[0].mxu0
    %335 = vdwg.mxu0
    %v336 = vround.ne.pseudo %v322
    %v337 = vround.ne.pseudo %v325
    %v338 = vround.ne.pseudo %v330
    %v339 = vround.ne.pseudo %v333
    %v340 = vmax.f32 %v336, 0.0
    %v341 = vmax.f32 %v337, 0.0
    %v342 = vmax.f32 %v338, 0.0
    %v343 = vmax.f32 %v339, 0.0
    %v344 = vmin.f32 %v340, 3.0
    %v345 = vmin.f32 %v341, 3.0
    %v346 = vmin.f32 %v342, 3.0
    %v347 = vmin.f32 %v343, 3.0
    %v348 = vpack.c.bf16 %v345, %v344
    %v349 = vpack.c.bf16 %v347, %v346
    %v350 = vld [vmem:[%s4 + $0x40] sm:$0xff]
    %v351 = vld [vmem:[%s4 + $0x48] sm:$0xff]
    %v352 = vld [vmem:[%s3] sm:$0xf]
    %v353 = vld [vmem:[%s3 + $0x4] sm:$0xf]
    %355 = vset.pattern.permute.xlu0 0
    %356 = vperm.xlu0 %355, %v350
    %v357 = vpop.permute.xlu0 %356
    %360 = vset.pattern.permute.xlu0 0
    %361 = vperm.xlu0 %360, %v351
    %v362 = vpop.permute.xlu0 %361
    %v366 = vunpack.c.l.b16 %v352
    %v367 = vunpack.c.l.b16 %v353
    %v368 = vpack.c.b16 %v367, %v366
    %v370 = vsel %vm280, %v368, 0
    %372 = vmatprep.subr.bf16.mxu0 0
    %373 = vmatpush1.bf16.msra.mxu0 %v348
    %374 = vmatprep.subr.bf16.mxu0 0
    %375 = vmatpush1.bf16.msra.mxu0 %v349
    %376 = vmatprep.subr.bf16.mxu0 0
    %377 = vmatpush1.bf16.msra.mxu0 0
    %378 = vmatprep.subr.bf16.mxu0 0
    %379 = vmatpush1.bf16.msra.mxu0 0
    %380 = vmatprep.subr.bf16.mxu0 0
    %381 = vmatpush1.bf16.msra.mxu0 0
    %382 = vmatprep.subr.bf16.mxu0 0
    %383 = vmatpush1.bf16.msra.mxu0 0
    %384 = vmatprep.subr.bf16.mxu0 0
    %385 = vmatpush1.bf16.msra.mxu0 0
    %386 = vmatprep.subr.bf16.mxu0 0
    %387 = vmatpush1.bf16.msra.mxu0 0
    %388 = vmatprep.subr.bf16.mxu0 0
    %389 = vmatpush1.bf16.msra.mxu0 0
    %390 = vmatprep.subr.bf16.mxu0 0
    %391 = vmatpush1.bf16.msra.mxu0 0
    %392 = vmatprep.subr.bf16.mxu0 0
    %393 = vmatpush1.bf16.msra.mxu0 0
    %394 = vmatprep.subr.bf16.mxu0 0
    %395 = vmatpush1.bf16.msra.mxu0 0
    %396 = vmatprep.subr.bf16.mxu0 0
    %397 = vmatpush1.bf16.msra.mxu0 0
    %398 = vmatprep.subr.bf16.mxu0 0
    %399 = vmatpush1.bf16.msra.mxu0 0
    %400 = vmatprep.subr.bf16.mxu0 0
    %401 = vmatpush1.bf16.msra.mxu0 0
    %402 = vmatprep.subr.bf16.mxu0 0
    %403 = vmatpush1.bf16.msra.mxu0 0
    %404 = vmatprep.mubr.bf16.mxu0 0
    %405 = vmatmul.mubr.bf16.gmra.mrb[0].mxu0 %v370
    %v406 = vpop.f32.mrb[0].mxu0
    %v407 = vadd.f32 %v357, %v406
    %v408 = vpop.f32.mrb[0].mxu0
    %v409 = vpop.f32.mrb[0].mxu0
    %v410 = vadd.f32 %v362, %v409
    %v411 = vpop.f32.mrb[0].mxu0
    %412 = vdwg.mxu0
    %v413 = vround.ne.pseudo %v407
    %v414 = vround.ne.pseudo %v410
    %v415 = vmax.f32 %v413, -8.0
    %v416 = vmax.f32 %v414, -8.0
    %v417 = vmin.f32 %v415, 7.0
    %v418 = vmin.f32 %v416, 7.0
    %v419 = vmul.f32 %v417, 0.125
    %v420 = vmul.f32 %v418, 0.125
    %v421 = vpack.c.bf16 %v420, %v419
    %v423 = vunpack.c.l.b16 %v421
    %v424 = vunpack.c.h.b16 %v421
    %v425 = vpack.c.b16 %v423, %v423
    %v426 = vpack.c.b16 %v424, %v424
    %429 = vst [vmem:[#allocation2] sm:$0xf] %v425
    %430 = vst [vmem:[#allocation2 + $0x4] sm:$0xf] %v426
    // Predicated region
    $region22: #{tpu_custom_call.1} parent=1 // pred_check
      _
    $region23: #{tpu_custom_call.1} parent=1 // pred_check_branch
      %432 = sbr.rel (0) target = $region25
    $region24: #{tpu_custom_call.1} parent=1 // pred_region
      %s434 = ssub.s32 128, 128
      %435 = vsyncadd [#allocation3], %s434
      %s436 = sshll.u32 [#allocation2], 4
      %s437 = int_to_ptr.vmem [resolvable:$true] %s436
      %442 = dma.vmem_to_hbm [thread:$0]  %s437, 128, %s5, [#allocation3], 64, 64, 4
    $region25: #{tpu_custom_call.1} parent=1 // pred_fallthru
      _
    // Predicated region
    $region26: #{tpu_custom_call.1} parent=1 // pred_check
      _
    $region27: #{tpu_custom_call.1} parent=1 // pred_check_branch
      %444 = sbr.rel (0) target = $region29
    $region28: #{tpu_custom_call.1} parent=1 // pred_region
      %445 = dma.done [#allocation3], 128
    $region29: #{tpu_custom_call.1} parent=1 // pred_fallthru
      _
    %446 = vsyncpa [#allocation3], 1

</llo_original>
